<compile_context>
chip_gen: v6e
topology: v6e:2x2x1
jax: 0.10.0
libtpu: 0.0.40
codegen_flags: <defaults>
</compile_context>

<pallas_src>
import functools

import jax
import jax.numpy as jnp
from jax.experimental import pallas as pl
from jax.experimental.pallas import tpu as pltpu


def _chebynet_kernel(*refs, K, bt, N, F, has_adj):
    # Ref shapes (per grid step i over batch groups):
    #   a_ref : ((K-1)*N, N)     bf16   stacked supports k = 1..K-1  (if has_adj)
    #   x_ref : (1, N, bt*F)     bf16   columns ordered (b_in_group, f)
    #   w_ref : (K*F, O_pad)     bf16   rows ordered (k, f), zero-padded along O
    #   o_ref : (bt, N, O_pad)   bf16
    if has_adj:
        a_ref, x_ref, w_ref, o_ref = refs
    else:
        x_ref, w_ref, o_ref = refs

    xg = x_ref[0]                 # (N, bt*F) bf16
    w = w_ref[...]                # (K*F, O_pad) bf16

    if has_adj:
        # One MXU matmul covering all supports k=1..K-1 and all bt batches of
        # this step: ((K-1)*N, N) @ (N, bt*F), f32 accumulation.
        y = jnp.dot(a_ref[...], xg, preferred_element_type=jnp.float32)
        y = y.astype(xg.dtype)    # bf16 operand for the fused weight matmul

    for b in range(bt):           # static, unrolled over batches in this step
        cols = slice(b * F, (b + 1) * F)
        parts = [xg[:, cols]]                                   # k = 0 (identity)
        if has_adj:
            parts += [y[(k - 1) * N:k * N, cols] for k in range(1, K)]
        z = parts[0] if len(parts) == 1 else jnp.concatenate(parts, axis=1)
        # Fused weight stage: (N, K*F) @ (K*F, O_pad), f32 accumulate.
        out = jnp.dot(z, w, preferred_element_type=jnp.float32)
        # f32 ReLU epilogue, bf16 lane-dense (unmasked) store.
        o_ref[b] = jnp.maximum(out, 0.0).astype(o_ref.dtype)


def generate_cheby_adj(L, K):
    """Same recurrence as the PyTorch helper (powers of L, adj_0 = I). f32."""
    N = L.shape[1]
    support = [jnp.eye(N, dtype=L.dtype)]
    if K > 1:
        support.append(L)
    for _ in range(2, K):
        support.append(jnp.matmul(support[-1], L))
    return support  # list of (N, N)


def make_cheby_supports(L, K, dtype=jnp.bfloat16):
    """Precompute the stacked k>=1 supports ONCE (L is fixed per model)."""
    if K <= 1:
        return None
    adjs = generate_cheby_adj(L, K)                       # f32 math
    return jnp.concatenate(adjs[1:], axis=0).astype(dtype)  # ((K-1)*N, N)


def pack_chebynet_weights(weights, dtype=jnp.bfloat16, lane=128):
    """(K, F, O) -> (K*F, O_pad) bf16, zero-padded along O to a lane multiple."""
    K, F, O = weights.shape
    o_pad = max(lane, ((O + lane - 1) // lane) * lane)
    w_cat = weights.astype(dtype).reshape(K * F, O)
    return jnp.pad(w_cat, ((0, 0), (0, o_pad - O)))


def chebynet_forward(x, a_stack, w_cat, num_out, *, batch_tile=None):
    """x: (B, N, F) f32; a_stack: ((K-1)*N, N) bf16 or None; w_cat: (K*F, O_pad) bf16."""
    B, N, F = x.shape
    KF, O_pad = w_cat.shape
    assert KF % F == 0
    K = KF // F
    has_adj = a_stack is not None
    if has_adj:
        assert a_stack.shape == ((K - 1) * N, N)
    dt = w_cat.dtype

    if batch_tile is None:
        batch_tile = 1
        for cand in range(1, B + 1):
            if B % cand == 0 and cand * N <= 512:
                batch_tile = cand
    bt = batch_tile
    assert B % bt == 0, "batch_tile must divide batch size"
    G = B // bt

    # Wrapper-side relayout (layout plumbing only): (B,N,F) -> (G, N, bt*F),
    # columns ordered (batch_in_group, feature).
    xg = (x.astype(dt)
            .reshape(G, bt, N, F)
            .transpose(0, 2, 1, 3)
            .reshape(G, N, bt * F))

    kernel = functools.partial(_chebynet_kernel, K=K, bt=bt, N=N, F=F,
                               has_adj=has_adj)

    in_specs = []
    operands = []
    if has_adj:
        in_specs.append(pl.BlockSpec(((K - 1) * N, N), lambda i: (0, 0)))
        operands.append(a_stack)
    in_specs += [
        pl.BlockSpec((1, N, bt * F), lambda i: (i, 0, 0)),
        pl.BlockSpec((KF, O_pad), lambda i: (0, 0)),
    ]
    operands += [xg, w_cat]

    # Cost hint (real work only: no kron zeros, adjacency stage at width F).
    flops = 2 * B * N * KF * O_pad
    if has_adj:
        flops += 2 * (K - 1) * N * N * B * F
    bytes_accessed = (xg.size * 2 + w_cat.size * 2 + B * N * O_pad * 2
                      + (a_stack.size * 2 if has_adj else 0))

    out_pad = pl.pallas_call(
        kernel,
        out_shape=jax.ShapeDtypeStruct((B, N, O_pad), dt),
        grid=(G,),
        in_specs=in_specs,
        out_specs=pl.BlockSpec((bt, N, O_pad), lambda i: (i, 0, 0)),
        compiler_params=pltpu.CompilerParams(
            dimension_semantics=("parallel",),       # megacore split on v7x
            vmem_limit_bytes=32 * 1024 * 1024),      # tiny residency; safe on v5e/v6e/v7x
        cost_estimate=pl.CostEstimate(
            flops=int(flops), transcendentals=0,
            bytes_accessed=int(bytes_accessed)),
    )(*operands)

    # Strip lane padding, restore f32 (module returns f32). Pure layout plumbing.
    return out_pad[:, :, :num_out].astype(jnp.float32)


def init_chebynet_params(key, K, xdim, num_out):
    """Deterministic Xavier-normal init matching nn.init.xavier_normal_."""
    std = (2.0 / (xdim + num_out)) ** 0.5
    keys = jax.random.split(key, K)
    ws = [std * jax.random.normal(k, (xdim, num_out), dtype=jnp.float32)
          for k in keys]
    return jnp.stack(ws, axis=0)  # (K, xdim, num_out)


if __name__ == "__main__":
    # Small shapes consistent with the module: B graphs of N nodes (EEG
    # channels), xdim features per node, K Chebyshev orders, num_out outputs.
    B, N, xdim, K, num_out = 4, 16, 8, 3, 32

    key = jax.random.PRNGKey(0)
    kx, kl, kw = jax.random.split(key, 3)

    x = jax.random.normal(kx, (B, N, xdim), dtype=jnp.float32)
    L_raw = jax.random.normal(kl, (N, N), dtype=jnp.float32)
    L = 0.5 * (L_raw + L_raw.T) / N          # symmetric "Laplacian"-like matrix
    W = init_chebynet_params(kw, K, xdim, num_out)

    # Hoisted, once-per-model preprocessing (L and W are fixed parameters).
    a_stack = make_cheby_supports(L, K)       # ((K-1)*N, N) bf16
    w_cat = pack_chebynet_weights(W)          # (K*xdim, O_pad) bf16

    out = chebynet_forward(x, a_stack, w_cat, num_out, batch_tile=2)
    out = jax.block_until_ready(out)

    # Plain-JAX reference replicating the kernel numerics (bf16 inputs, f32
    # accumulate, bf16 adjacency intermediate, bf16 output rounding absorbed
    # by the tolerance).
    bf16, f32 = jnp.bfloat16, jnp.float32
    x_b = x.astype(bf16).astype(f32)
    w_b = W.astype(bf16).astype(f32)
    adjs = generate_cheby_adj(L, K)
    ref = jnp.einsum("bnf,fo->bno", x_b, w_b[0])          # k = 0, identity support
    for k in range(1, K):
        a_k = adjs[k].astype(bf16).astype(f32)
        ax = jnp.einsum("nm,bmf->bnf", a_k, x_b)
        ax = ax.astype(bf16).astype(f32)                  # kernel casts the intermediate
        ref = ref + jnp.einsum("bnf,fo->bno", ax, w_b[k])
    ref = jnp.maximum(ref, 0.0)

    assert out.shape == (B, N, num_out)
    err = float(jnp.max(jnp.abs(out - ref)))
    assert jnp.allclose(out, ref, atol=2e-2, rtol=2e-2), err

    print("KERNEL_OK")
</pallas_src>

<mosaic_0001>
module attributes {stable_mosaic.version = 11 : i64} {
  func.func @_chebynet_kernel(%arg0: i32, %arg1: memref<32x16xbf16, #tpu.memory_space<vmem>>, %arg2: memref<1x16x16xbf16, #tpu.memory_space<vmem>>, %arg3: memref<24x128xbf16, #tpu.memory_space<vmem>>, %arg4: memref<2x16x128xbf16, #tpu.memory_space<vmem>>) attributes {dimension_semantics = [#tpu.dimension_semantics<parallel>], iteration_bounds = array<i64: 2>, scalar_prefetch = 0 : i64, scratch_operands = 0 : i64, tpu.core_type = #tpu.core_type<tc>, window_params = [{pipeline_mode = #tpu.pipeline_mode<synchronous>, transform_indices = @transform_0, window_bounds = array<i64: 32, 16>}, {transform_indices = @transform_1, window_bounds = array<i64: 1, 16, 16>}, {pipeline_mode = #tpu.pipeline_mode<synchronous>, transform_indices = @transform_2, window_bounds = array<i64: 24, 128>}, {transform_indices = @transform_3, window_bounds = array<i64: 2, 16, 128>}]} {
    %c0 = arith.constant 0 : index
    %c0_0 = arith.constant 0 : index
    %c0_1 = arith.constant 0 : index
    %0 = vector.load %arg2[%c0, %c0_0, %c0_1] : memref<1x16x16xbf16, #tpu.memory_space<vmem>>, vector<1x16x16xbf16>
    %1 = vector.shape_cast %0 : vector<1x16x16xbf16> to vector<16x16xbf16>
    %c0_2 = arith.constant 0 : index
    %c0_3 = arith.constant 0 : index
    %2 = vector.load %arg3[%c0_2, %c0_3] : memref<24x128xbf16, #tpu.memory_space<vmem>>, vector<24x128xbf16>
    %c0_4 = arith.constant 0 : index
    %c0_5 = arith.constant 0 : index
    %3 = vector.load %arg1[%c0_4, %c0_5] : memref<32x16xbf16, #tpu.memory_space<vmem>>, vector<32x16xbf16>
    %cst = arith.constant dense<0.000000e+00> : vector<32x16xf32>
    %4 = tpu.matmul %3, %1, %cst {dimension_numbers = #tpu.dot_dimension_numbers<[1], [0], [0], [1], [0, 0, 1, 1], [], []>} : vector<32x16xbf16>, vector<16x16xbf16>, vector<32x16xf32> -> vector<32x16xf32>
    %5 = arith.truncf %4 : vector<32x16xf32> to vector<32x16xbf16>
    %6 = vector.extract_strided_slice %1 {offsets = [0, 0], sizes = [16, 8], strides = [1, 1]} : vector<16x16xbf16> to vector<16x8xbf16>
    %7 = vector.extract_strided_slice %5 {offsets = [0, 0], sizes = [16, 8], strides = [1, 1]} : vector<32x16xbf16> to vector<16x8xbf16>
    %8 = vector.extract_strided_slice %5 {offsets = [16, 0], sizes = [16, 8], strides = [1, 1]} : vector<32x16xbf16> to vector<16x8xbf16>
    %9 = tpu.concatenate %6, %7, %8 in 1 : vector<16x8xbf16>, vector<16x8xbf16>, vector<16x8xbf16> -> vector<16x24xbf16>
    %cst_6 = arith.constant dense<0.000000e+00> : vector<16x128xf32>
    %10 = tpu.matmul %9, %2, %cst_6 {dimension_numbers = #tpu.dot_dimension_numbers<[1], [0], [0], [1], [0, 0, 1, 1], [], []>} : vector<16x24xbf16>, vector<24x128xbf16>, vector<16x128xf32> -> vector<16x128xf32>
    %cst_7 = arith.constant 0.000000e+00 : f32
    %11 = vector.broadcast %cst_7 : f32 to vector<16x128xf32>
    %12 = arith.maximumf %10, %11 : vector<16x128xf32>
    %13 = arith.truncf %12 : vector<16x128xf32> to vector<16x128xbf16>
    %c0_8 = arith.constant 0 : index
    %c0_9 = arith.constant 0 : index
    %c0_10 = arith.constant 0 : index
    %14 = vector.load %arg4[%c0_8, %c0_9, %c0_10] : memref<2x16x128xbf16, #tpu.memory_space<vmem>>, vector<1x16x128xbf16>
    %15 = vector.shape_cast %14 : vector<1x16x128xbf16> to vector<16x128xbf16>
    %16 = vector.shape_cast %13 : vector<16x128xbf16> to vector<1x16x128xbf16>
    tpu.vector_store %arg4[%c0_8, %c0_9, %c0_10], %16 {strides = array<i32>} : memref<2x16x128xbf16, #tpu.memory_space<vmem>>, vector<1x16x128xbf16>,
    %17 = vector.extract_strided_slice %1 {offsets = [0, 8], sizes = [16, 8], strides = [1, 1]} : vector<16x16xbf16> to vector<16x8xbf16>
    %18 = vector.extract_strided_slice %5 {offsets = [0, 8], sizes = [16, 8], strides = [1, 1]} : vector<32x16xbf16> to vector<16x8xbf16>
    %19 = vector.extract_strided_slice %5 {offsets = [16, 8], sizes = [16, 8], strides = [1, 1]} : vector<32x16xbf16> to vector<16x8xbf16>
    %20 = tpu.concatenate %17, %18, %19 in 1 : vector<16x8xbf16>, vector<16x8xbf16>, vector<16x8xbf16> -> vector<16x24xbf16>
    %cst_11 = arith.constant dense<0.000000e+00> : vector<16x128xf32>
    %21 = tpu.matmul %20, %2, %cst_11 {dimension_numbers = #tpu.dot_dimension_numbers<[1], [0], [0], [1], [0, 0, 1, 1], [], []>} : vector<16x24xbf16>, vector<24x128xbf16>, vector<16x128xf32> -> vector<16x128xf32>
    %cst_12 = arith.constant 0.000000e+00 : f32
    %22 = vector.broadcast %cst_12 : f32 to vector<16x128xf32>
    %23 = arith.maximumf %21, %22 : vector<16x128xf32>
    %24 = arith.truncf %23 : vector<16x128xf32> to vector<16x128xbf16>
    %c1 = arith.constant 1 : index
    %c0_13 = arith.constant 0 : index
    %c0_14 = arith.constant 0 : index
    %25 = vector.load %arg4[%c1, %c0_13, %c0_14] : memref<2x16x128xbf16, #tpu.memory_space<vmem>>, vector<1x16x128xbf16>
    %26 = vector.shape_cast %25 : vector<1x16x128xbf16> to vector<16x128xbf16>
    %27 = vector.shape_cast %24 : vector<16x128xbf16> to vector<1x16x128xbf16>
    tpu.vector_store %arg4[%c1, %c0_13, %c0_14], %27 {strides = array<i32>} : memref<2x16x128xbf16, #tpu.memory_space<vmem>>, vector<1x16x128xbf16>,
    return
  }
  func.func @transform_0(%arg0: i32) -> (i32, i32) {
    %c0_i32 = arith.constant 0 : i32
    %c0_i32_0 = arith.constant 0 : i32
    %c0_i32_1 = arith.constant 0 : i32
    return %c0_i32, %c0_i32_0 : i32, i32
  }
  func.func @transform_1(%arg0: i32) -> (i32, i32, i32) {
    %c0_i32 = arith.constant 0 : i32
    %c0_i32_0 = arith.constant 0 : i32
    %c0_i32_1 = arith.constant 0 : i32
    return %arg0, %c0_i32, %c0_i32_0 : i32, i32, i32
  }
  func.func @transform_2(%arg0: i32) -> (i32, i32) {
    %c0_i32 = arith.constant 0 : i32
    %c0_i32_0 = arith.constant 0 : i32
    %c0_i32_1 = arith.constant 0 : i32
    return %c0_i32, %c0_i32_0 : i32, i32
  }
  func.func @transform_3(%arg0: i32) -> (i32, i32, i32) {
    %c0_i32 = arith.constant 0 : i32
    %c0_i32_0 = arith.constant 0 : i32
    %c0_i32_1 = arith.constant 0 : i32
    return %arg0, %c0_i32, %c0_i32_0 : i32, i32, i32
  }
}

</mosaic_0001>

<llo_original>
// kernel: tpu_custom_call.1
$region0: #{tpu_custom_call.1}
  #allocation0 [shape = 'u32[]', space=smem, size = 0x4, offset = 0x4, fixed_abs, tag = 'smem constant byte address 0x4 - core index']
  #allocation1 [shape = 'u32[144,128]{1,0:T(1,128)}', space=vmem, size = 0x12000, scoped, tag = 'internal scratch']
  %s0 = inlined_call_operand.vmem [shape: bf16[32,16], index: 0, kind: input, shape index: {}]
  %s1 = inlined_call_operand.vmem [shape: bf16[2,16,16], index: 1, kind: input, shape index: {}]
  %s2 = inlined_call_operand.hbm [shape: bf16[24,128], index: 2, kind: input, shape index: {}]
  %s3 = inlined_call_operand.hbm [shape: bf16[4,16,128], index: 3, kind: output, shape index: {}]
  %s4 = sld [smem:[#allocation0]]
  $region49: #{tpu_custom_call.1} parent=0
    _
  %s6 = ssub.s32 1, %s4
  %s7 = scalar_select 0, %s6, %s4
  $region1: #{tpu_custom_call.1} parent=0
    #allocation2 [shape = 'u8[6144]{0}', space=vmem, size = 0x1800, scoped, tag = 'input window, operand 2, single buffered']
    #allocation3 [shape = 's32[2]{0}', space=sflag, size = 0x8, scoped, tag = 'scoped memory for tpu_custom_call.1']
    #allocation4 [shape = 's32[2]{0}', space=sflag, size = 0x8, scoped, tag = 'scoped memory for tpu_custom_call.1']
    #allocation5 [shape = 'u8[16384]{0}', space=vmem, size = 0x4000, scoped, tag = 'output window, operand 0']
    %8 = vsyncpa [#allocation3], 0
    %9 = vsyncpa [#allocation4], 0
    %s10 = scalar_lea.sflag [#allocation4], 1
    %11 = vsyncpa %s10, 0
    loop: start=0, step=1, limit=4
    $region2: #{tpu_custom_call.1} parent=1 // loop_pre_header
      _
    $region3: #{tpu_custom_call.1} parent=1 // loop_header
      %s13 = sphi 0, %s17
      %p14 = scmp.ge.s32.totalorder %s13, 4
      %s21 = sphi 0, %s21
      %s23 = sphi 0, %s21
      %s24 = sphi 0, %s23
      %s38 = sphi 0, %s24
      %s44 = sphi 0, %s46
      %s47 = sphi 0, %s44
      %s48 = sphi 0, %s47
      %s64 = sphi 0, %s48
      %s68 = sphi 0, %s68
      %s70 = sphi 0, %s68
      %s71 = sphi 0, %s70
      %s85 = sphi 0, %s71
      %s91 = sphi 0, %s93
      %s94 = sphi 0, %s91
      %s95 = sphi 0, %s94
      %s111 = sphi 0, %s95
    $region4: #{tpu_custom_call.1} parent=1 // loop_header_branch
      %16 = sbr.rel (%p14) target = $region8
    $region5: #{tpu_custom_call.1} parent=1 // loop_body
      %s18 = ssub.s32 %s13, 1
      %s19 = ssub.s32 %s13, 2
      %s20 = sadd.s32 %s13, 1
      %s22 = sadd.s32 %s21, 1
      %p25 = scmp.eq.s32.totalorder %s13, 1
      %p26 = scmp.ne.s32.totalorder %s21, %s23
      %p27 = scmp.eq.s32.totalorder %s13, 0
      %p28 = por %p26, %p27
      %p29 = scmp.ne.s32.totalorder %s21, %s23
      %p30 = scmp.eq.s32.totalorder %s18, 1
      %p31 = por %p29, %p30
      %p32 = scmp.ne.s32.totalorder %s23, %s24
      %p33 = scmp.eq.s32.totalorder %s18, 0
      %p34 = por %p32, %p33
      %p35 = scmp.ne.s32.totalorder %s23, %s24
      %p36 = scmp.eq.s32.totalorder %s19, 1
      %p37 = por %p35, %p36
      %p39 = scmp.ne.s32.totalorder %s24, %s38
      %p40 = scmp.eq.s32.totalorder %s19, 0
      %p41 = por %p39, %p40
      %s42 = ssub.s32 %s13, %s20
      %p43 = scmp.eq.s32.totalorder %s42, 0
      %s45 = sadd.s32 %s44, 1
      %s46 = scalar_select %p43, %s44, %s45
      %p49 = pneg %p43
      %p50 = scmp.eq.s32.totalorder %s13, 1
      %p51 = por %p49, %p50
      %p52 = scmp.ne.s32.totalorder %s44, %s47
      %p53 = scmp.eq.s32.totalorder %s13, 0
      %p54 = por %p52, %p53
      %p55 = scmp.ne.s32.totalorder %s44, %s47
      %p56 = scmp.eq.s32.totalorder %s18, 1
      %p57 = por %p55, %p56
      %p58 = scmp.ne.s32.totalorder %s47, %s48
      %p59 = scmp.eq.s32.totalorder %s18, 0
      %p60 = por %p58, %p59
      %p61 = scmp.ne.s32.totalorder %s47, %s48
      %p62 = scmp.eq.s32.totalorder %s19, 1
      %p63 = por %p61, %p62
      %p65 = scmp.ne.s32.totalorder %s48, %s64
      %p66 = scmp.eq.s32.totalorder %s19, 0
      %p67 = por %p65, %p66
      %s69 = sadd.s32 %s68, 1
      %p72 = scmp.eq.s32.totalorder %s13, 1
      %p73 = scmp.ne.s32.totalorder %s68, %s70
      %p74 = scmp.eq.s32.totalorder %s13, 0
      %p75 = por %p73, %p74
      %p76 = scmp.ne.s32.totalorder %s68, %s70
      %p77 = scmp.eq.s32.totalorder %s18, 1
      %p78 = por %p76, %p77
      %p79 = scmp.ne.s32.totalorder %s70, %s71
      %p80 = scmp.eq.s32.totalorder %s18, 0
      %p81 = por %p79, %p80
      %p82 = scmp.ne.s32.totalorder %s70, %s71
      %p83 = scmp.eq.s32.totalorder %s19, 1
      %p84 = por %p82, %p83
      %p86 = scmp.ne.s32.totalorder %s71, %s85
      %p87 = scmp.eq.s32.totalorder %s19, 0
      %p88 = por %p86, %p87
      %s89 = ssub.s32 %s13, %s20
      %p90 = scmp.eq.s32.totalorder %s89, 0
      %s92 = sadd.s32 %s91, 1
      %s93 = scalar_select %p90, %s91, %s92
      %p96 = pneg %p90
      %p97 = scmp.eq.s32.totalorder %s13, 1
      %p98 = por %p96, %p97
      %p99 = scmp.ne.s32.totalorder %s91, %s94
      %p100 = scmp.eq.s32.totalorder %s13, 0
      %p101 = por %p99, %p100
      %p102 = scmp.ne.s32.totalorder %s91, %s94
      %p103 = scmp.eq.s32.totalorder %s18, 1
      %p104 = por %p102, %p103
      %p105 = scmp.ne.s32.totalorder %s94, %s95
      %p106 = scmp.eq.s32.totalorder %s18, 0
      %p107 = por %p105, %p106
      %p108 = scmp.ne.s32.totalorder %s94, %s95
      %p109 = scmp.eq.s32.totalorder %s19, 1
      %p110 = por %p108, %p109
      %p112 = scmp.ne.s32.totalorder %s95, %s111
      %p113 = scmp.eq.s32.totalorder %s19, 0
      %p114 = por %p112, %p113
      %p115 = scmp.le.s32.totalorder 1, %s13
      %p116 = scmp.lt.s32.totalorder %s13, 3
      %p117 = pnand %p115, %p116
      %p118 = pneg %p117
      // Predicated region
      $region9: #{tpu_custom_call.1} parent=5 // pred_check
        _
      $region10: #{tpu_custom_call.1} parent=5 // pred_check_branch
        %120 = sbr.rel (%p117) target = $region12
      $region11: #{tpu_custom_call.1} parent=5 // pred_region
        %s121 = ssub.s32 %s13, 1
        // Predicated region
        $region13: #{tpu_custom_call.1} parent=11 // pred_check
          %p122 = pneg %p34
        $region14: #{tpu_custom_call.1} parent=11 // pred_check_branch
          %124 = sbr.rel (%p122) target = $region16
        $region15: #{tpu_custom_call.1} parent=11 // pred_region
          _
        $region16: #{tpu_custom_call.1} parent=11 // pred_fallthru
          _
        // Predicated region
        $region17: #{tpu_custom_call.1} parent=11 // pred_check
          %p125 = pneg %p81
        $region18: #{tpu_custom_call.1} parent=11 // pred_check_branch
          %127 = sbr.rel (%p125) target = $region20
        $region19: #{tpu_custom_call.1} parent=11 // pred_region
          %s129 = ssub.s32 192, 192
          %130 = vsyncadd [#allocation3], %s129
          %s131 = sshll.u32 [#allocation2], 4
          %s132 = int_to_ptr.vmem [resolvable:$true] %s131
          %137 = dma.hbm_to_vmem [thread:$0]  %s2, 192, %s132, [#allocation3], 64, 64, 4
        $region20: #{tpu_custom_call.1} parent=11 // pred_fallthru
          _
      $region12: #{tpu_custom_call.1} parent=5 // pred_fallthru
        _
      %p138 = scmp.lt.s32.totalorder %s13, 2
      // Predicated region
      $region21: #{tpu_custom_call.1} parent=5 // pred_check
        %p139 = pneg %p138
      $region22: #{tpu_custom_call.1} parent=5 // pred_check_branch
        %141 = sbr.rel (%p139) target = $region24
      $region23: #{tpu_custom_call.1} parent=5 // pred_region
        // Predicated region
        $region25: #{tpu_custom_call.1} parent=23 // pred_check
          %p142 = pneg %p54
        $region26: #{tpu_custom_call.1} parent=23 // pred_check_branch
          %144 = sbr.rel (%p142) target = $region28
        $region27: #{tpu_custom_call.1} parent=23 // pred_region
          %p145 = scmp.lt.s32.totalorder %s13, 1
          %s146 = scalar_select %p145, %s13, 1
          %s147 = smul.addr %s146, 2
          %s148 = smul.addr %s147, 4
          %s149 = scalar_lea.vmem %s1, %s148
        $region28: #{tpu_custom_call.1} parent=23 // pred_fallthru
          _
      $region24: #{tpu_custom_call.1} parent=5 // pred_fallthru
        _
      %p150 = scmp.le.s32.totalorder 1, %s13
      %p151 = scmp.lt.s32.totalorder %s13, 3
      %p152 = pnand %p150, %p151
      %p153 = pneg %p152
      // Predicated region
      $region29: #{tpu_custom_call.1} parent=5 // pred_check
        _
      $region30: #{tpu_custom_call.1} parent=5 // pred_check_branch
        %155 = sbr.rel (%p152) target = $region32
      $region31: #{tpu_custom_call.1} parent=5 // pred_region
        %s156 = ssub.s32 %s13, 1
        // Predicated region
        $region33: #{tpu_custom_call.1} parent=31 // pred_check
          %p157 = pneg %p81
        $region34: #{tpu_custom_call.1} parent=31 // pred_check_branch
          %159 = sbr.rel (%p157) target = $region36
        $region35: #{tpu_custom_call.1} parent=31 // pred_region
          %160 = dma.done [#allocation3], 192
        $region36: #{tpu_custom_call.1} parent=31 // pred_fallthru
          _
        %p161 = pneg %p34
        %p162 = pneg %p31
        %p163 = scmp.lt.s32.totalorder %s18, 1
        %s164 = scalar_select %p163, %s18, 1
        %s165 = smul.addr %s164, 2
        %s166 = smul.addr %s165, 4
        %s167 = scalar_lea.vmem %s1, %s166
        %p168 = pneg %p60
        %p169 = pneg %p57
        %p170 = pneg %p81
        %p171 = pneg %p78
        %p172 = pneg %p107
        %p173 = pneg %p104
        %s174 = sand.u32 %s94, 1
        %s175 = scalar_lea.sflag [#allocation4], %s174
        %s176 = sand.u32 %s94, 1
        %s177 = smul.addr %s176, 16
        %s178 = scalar_lea.vmem [#allocation5], %s177
        %p179 = scmp.lt.s32.totalorder %s18, 1
        %s180 = scalar_select %p179, %s18, 1
        %s181 = smul.addr %s180, 2
        %s182 = smul.addr %s181, 4
        %s183 = scalar_lea.vmem %s1, %s182
        %s184 = smul.u32 2, %s18
        %v186 = vld [vmem:[%s183] sm:$0xf]
        %v187 = vld [vmem:[%s183 + $0x4] sm:$0xf]
        %v188 = vld [vmem:[#allocation2] sm:$0xf]
        %v189 = vld [vmem:[#allocation2 + $0x4] sm:$0xf]
        %v190 = vld [vmem:[#allocation2 + $0x8] sm:$0xf]
        %v191 = vld [vmem:[%s0] sm:$0xf]
        %v192 = vld [vmem:[%s0 + $0x4] sm:$0xf]
        %v193 = vld [vmem:[%s0 + $0x8] sm:$0xf]
        %v194 = vld [vmem:[%s0 + $0xc] sm:$0xf]
        %v199 = vunpack.c.l.b16 %v191
        %v200 = vunpack.c.l.b16 %v192
        %v201 = vunpack.c.l.b16 %v193
        %v202 = vunpack.c.l.b16 %v194
        %v203 = vpack.c.b16 %v200, %v199
        %v204 = vpack.c.b16 %v202, %v201
        %v207 = vunpack.c.l.b16 %v186
        %v208 = vunpack.c.l.b16 %v187
        %v209 = vpack.c.b16 %v208, %v207
        %vm211 = vcmask 130048
        %v213 = vsel %vm211, %v203, 0
        %v216 = vsel %vm211, %v204, 0
        %218 = vmatprep.subr.bf16.mxu0 0
        %219 = vmatpush1.bf16.msra.mxu0 0
        %220 = vmatprep.subr.bf16.mxu0 0
        %221 = vmatpush1.bf16.msra.mxu0 0
        %222 = vmatprep.subr.bf16.mxu0 0
        %223 = vmatpush1.bf16.msra.mxu0 0
        %224 = vmatprep.subr.bf16.mxu0 0
        %225 = vmatpush1.bf16.msra.mxu0 0
        %226 = vmatprep.subr.bf16.mxu0 0
        %227 = vmatpush1.bf16.msra.mxu0 0
        %228 = vmatprep.subr.bf16.mxu0 0
        %229 = vmatpush1.bf16.msra.mxu0 0
        %230 = vmatprep.subr.bf16.mxu0 0
        %231 = vmatpush1.bf16.msra.mxu0 0
        %232 = vmatprep.subr.bf16.mxu0 0
        %233 = vmatpush1.bf16.msra.mxu0 %v209
        %234 = vmatprep.subr.bf16.mxu0 0
        %235 = vmatpush2.bf16.msra.mxu0 0
        %236 = vmatprep.subr.bf16.mxu0 0
        %237 = vmatpush2.bf16.msra.mxu0 0
        %238 = vmatprep.subr.bf16.mxu0 0
        %239 = vmatpush2.bf16.msra.mxu0 0
        %240 = vmatprep.subr.bf16.mxu0 0
        %241 = vmatpush2.bf16.msra.mxu0 0
        %242 = vmatprep.subr.bf16.mxu0 0
        %243 = vmatpush2.bf16.msra.mxu0 0
        %244 = vmatprep.subr.bf16.mxu0 0
        %245 = vmatpush2.bf16.msra.mxu0 0
        %246 = vmatprep.subr.bf16.mxu0 0
        %247 = vmatpush2.bf16.msra.mxu0 0
        %248 = vmatprep.subr.bf16.mxu0 0
        %249 = vmatpush2.bf16.msra.mxu0 0
        %250 = vmatprep.mubr.bf16.mxu0 0
        %251 = vmatmul.mubr.bf16.gmra.mxu0 %v213
        %v252 = vpop.f32.mrf.mxu0
        %v253 = vadd.f32 0.0, %v252
        %v254 = vpop.f32.mrf.mxu0
        %v255 = vpop.f32.mrf.mxu0
        %v256 = vadd.f32 0.0, %v255
        %v257 = vpop.f32.mrf.mxu0
        %258 = vmatprep.mubr.bf16.mxu0 0
        %259 = vmatmul.mubr.bf16.gmra.mxu0 %v216
        %v260 = vpop.f32.mrf.mxu0
        %v261 = vadd.f32 0.0, %v260
        %v262 = vpop.f32.mrf.mxu0
        %v263 = vpop.f32.mrf.mxu0
        %v264 = vadd.f32 0.0, %v263
        %v265 = vpop.f32.mrf.mxu0
        %266 = vdwg.mxu0
        %v267 = vpack.c.bf16 %v256, %v253
        %v268 = vpack.c.bf16 %v264, %v261
        %270 = vrot.lane.b32.xlu0 %v267, 8
        %v271 = vpop.permute.xlu0 %270
        %273 = vrot.lane.b32.xlu0 %v268, 16
        %v274 = vpop.permute.xlu0 %273
        %vm275 = vcmask 64512
        %v278 = vsel %vm275, %v209, %v271
        %v280 = vsel %vm211, %v278, %v274
        %v284 = vunpack.c.l.b16 %v188
        %v285 = vunpack.c.l.b16 %v189
        %v286 = vunpack.c.l.b16 %v190
        %v287 = vpack.c.b16 %v285, %v284
        %v288 = vpack.c.b16 %v286, %v286
        %vm290 = vcmask 195584
        %v291 = vsel %vm290, %v280, 0
        %vm293 = vcmask 1043456
        %v295 = vsel %vm293, %v288, 0
        %297 = vmatprep.subr.bf16.mxu0 0
        %298 = vmatpush1.bf16.msra.mxu0 0
        %299 = vmatprep.subr.bf16.mxu0 0
        %300 = vmatpush1.bf16.msra.mxu0 0
        %301 = vmatprep.subr.bf16.mxu0 0
        %302 = vmatpush1.bf16.msra.mxu0 0
        %303 = vmatprep.subr.bf16.mxu0 0
        %304 = vmatpush1.bf16.msra.mxu0 0
        %305 = vmatprep.subr.bf16.mxu0 0
        %306 = vmatpush1.bf16.msra.mxu0 0
        %307 = vmatprep.subr.bf16.mxu0 0
        %308 = vmatpush1.bf16.msra.mxu0 0
        %309 = vmatprep.subr.bf16.mxu0 0
        %310 = vmatpush1.bf16.msra.mxu0 %v295
        %311 = vmatprep.subr.bf16.mxu0 0
        %312 = vmatpush1.bf16.msra.mxu0 %v287
        %313 = vmatprep.subr.bf16.mxu0 0
        %314 = vmatpush2.bf16.msra.mxu0 0
        %315 = vmatprep.subr.bf16.mxu0 0
        %316 = vmatpush2.bf16.msra.mxu0 0
        %317 = vmatprep.subr.bf16.mxu0 0
        %318 = vmatpush2.bf16.msra.mxu0 0
        %319 = vmatprep.subr.bf16.mxu0 0
        %320 = vmatpush2.bf16.msra.mxu0 0
        %321 = vmatprep.subr.bf16.mxu0 0
        %322 = vmatpush2.bf16.msra.mxu0 0
        %323 = vmatprep.subr.bf16.mxu0 0
        %324 = vmatpush2.bf16.msra.mxu0 0
        %325 = vmatprep.subr.bf16.mxu0 0
        %326 = vmatpush2.bf16.msra.mxu0 0
        %327 = vmatprep.subr.bf16.mxu0 0
        %328 = vmatpush2.bf16.msra.mxu0 0
        %329 = vmatprep.mubr.bf16.mxu0 0
        %330 = vmatmul.mubr.bf16.gmra.mxu0 %v291
        %v331 = vpop.f32.mrf.mxu0
        %v332 = vadd.f32 0.0, %v331
        %v333 = vpop.f32.mrf.mxu0
        %v334 = vpop.f32.mrf.mxu0
        %v335 = vadd.f32 0.0, %v334
        %v336 = vpop.f32.mrf.mxu0
        %337 = vdwg.mxu0
        %v338 = vmax.f32 %v332, 0.0
        %v339 = vmax.f32 %v335, 0.0
        %v340 = vpack.c.bf16 %v339, %v338
        %v342 = vunpack.c.l.b16 %v340
        %v343 = vunpack.c.h.b16 %v340
        %v344 = vpack.c.b16 %v342, %v342
        %v345 = vpack.c.b16 %v343, %v343
        %348 = vst [vmem:[%s178] sm:$0xf] %v344
        %349 = vst [vmem:[%s178 + $0x4] sm:$0xf] %v345
        %350 = vrot.lane.b32.xlu0 %v209, 120
        %v351 = vpop.permute.xlu0 %350
        %352 = vrot.lane.b32.xlu0 %v268, 8
        %v353 = vpop.permute.xlu0 %352
        %v356 = vsel %vm275, %v351, %v267
        %v358 = vsel %vm211, %v356, %v353
        %v359 = vsel %vm290, %v358, 0
        %361 = vmatprep.subr.bf16.mxu0 0
        %362 = vmatpush1.bf16.msra.mxu0 0
        %363 = vmatprep.subr.bf16.mxu0 0
        %364 = vmatpush1.bf16.msra.mxu0 0
        %365 = vmatprep.subr.bf16.mxu0 0
        %366 = vmatpush1.bf16.msra.mxu0 0
        %367 = vmatprep.subr.bf16.mxu0 0
        %368 = vmatpush1.bf16.msra.mxu0 0
        %369 = vmatprep.subr.bf16.mxu0 0
        %370 = vmatpush1.bf16.msra.mxu0 0
        %371 = vmatprep.subr.bf16.mxu0 0
        %372 = vmatpush1.bf16.msra.mxu0 0
        %373 = vmatprep.subr.bf16.mxu0 0
        %374 = vmatpush1.bf16.msra.mxu0 %v295
        %375 = vmatprep.subr.bf16.mxu0 0
        %376 = vmatpush1.bf16.msra.mxu0 %v287
        %377 = vmatprep.subr.bf16.mxu0 0
        %378 = vmatpush2.bf16.msra.mxu0 0
        %379 = vmatprep.subr.bf16.mxu0 0
        %380 = vmatpush2.bf16.msra.mxu0 0
        %381 = vmatprep.subr.bf16.mxu0 0
        %382 = vmatpush2.bf16.msra.mxu0 0
        %383 = vmatprep.subr.bf16.mxu0 0
        %384 = vmatpush2.bf16.msra.mxu0 0
        %385 = vmatprep.subr.bf16.mxu0 0
        %386 = vmatpush2.bf16.msra.mxu0 0
        %387 = vmatprep.subr.bf16.mxu0 0
        %388 = vmatpush2.bf16.msra.mxu0 0
        %389 = vmatprep.subr.bf16.mxu0 0
        %390 = vmatpush2.bf16.msra.mxu0 0
        %391 = vmatprep.subr.bf16.mxu0 0
        %392 = vmatpush2.bf16.msra.mxu0 0
        %393 = vmatprep.mubr.bf16.mxu0 0
        %394 = vmatmul.mubr.bf16.gmra.mxu0 %v359
        %v395 = vpop.f32.mrf.mxu0
        %v396 = vadd.f32 0.0, %v395
        %v397 = vpop.f32.mrf.mxu0
        %v398 = vpop.f32.mrf.mxu0
        %v399 = vadd.f32 0.0, %v398
        %v400 = vpop.f32.mrf.mxu0
        %401 = vdwg.mxu0
        %v402 = vmax.f32 %v396, 0.0
        %v403 = vmax.f32 %v399, 0.0
        %v404 = vpack.c.bf16 %v403, %v402
        %v406 = vunpack.c.l.b16 %v404
        %v407 = vunpack.c.h.b16 %v404
        %v408 = vpack.c.b16 %v406, %v406
        %v409 = vpack.c.b16 %v407, %v407
        %s412 = scalar_lea.vmem %s178, 8 [#allocation5]
        %413 = vst [vmem:[%s412] sm:$0xf] %v408
        %414 = vst [vmem:[%s412 + $0x4] sm:$0xf] %v409
        %s415 = sand.u32 %s94, 1
        %s416 = scalar_lea.sflag [#allocation4], %s415
        %s417 = sand.u32 %s94, 1
        %s418 = smul.addr %s417, 16
        %s419 = scalar_lea.vmem [#allocation5], %s418
        // Predicated region
        $region37: #{tpu_custom_call.1} parent=31 // pred_check
          %p420 = pneg %p104
        $region38: #{tpu_custom_call.1} parent=31 // pred_check_branch
          %422 = sbr.rel (%p420) target = $region40
        $region39: #{tpu_custom_call.1} parent=31 // pred_region
          %s423 = smul.u32 2, %s18
          %s425 = ssub.s32 256, 256
          %426 = vsyncadd %s416, %s425
          %s427 = smul.addr %s423, 2
          %s428 = smul.addr %s427, 64
          %s429 = scalar_lea.hbm %s3, %s428
          %s430 = sshll.u32 %s419, 4
          %s431 = int_to_ptr.vmem [resolvable:$true] %s430
          %436 = dma.vmem_to_hbm [thread:$0]  %s431, 256, %s429, %s416, 64, 64, 4
        $region40: #{tpu_custom_call.1} parent=31 // pred_fallthru
          _
      $region32: #{tpu_custom_call.1} parent=5 // pred_fallthru
        _
      %p437 = scmp.le.s32.totalorder 2, %s13
      // Predicated region
      $region41: #{tpu_custom_call.1} parent=5 // pred_check
        %p438 = pneg %p437
      $region42: #{tpu_custom_call.1} parent=5 // pred_check_branch
        %440 = sbr.rel (%p438) target = $region44
      $region43: #{tpu_custom_call.1} parent=5 // pred_region
        %s441 = ssub.s32 %s13, 2
        // Predicated region
        $region45: #{tpu_custom_call.1} parent=43 // pred_check
          %p442 = pneg %p110
        $region46: #{tpu_custom_call.1} parent=43 // pred_check_branch
          %444 = sbr.rel (%p442) target = $region48
        $region47: #{tpu_custom_call.1} parent=43 // pred_region
          %s445 = sand.u32 %s95, 1
          %s446 = scalar_lea.sflag [#allocation4], %s445
          %s447 = sand.u32 %s95, 1
          %s448 = smul.addr %s447, 16
          %s449 = scalar_lea.vmem [#allocation5], %s448
          %450 = dma.done %s446, 256
        $region48: #{tpu_custom_call.1} parent=43 // pred_fallthru
          _
      $region44: #{tpu_custom_call.1} parent=5 // pred_fallthru
        _
    $region6: #{tpu_custom_call.1} parent=1 // loop_footer
      %s17 = sadd.s32 1, %s13
    $region7: #{tpu_custom_call.1} parent=1 // loop_footer_branch
      %12 = sbr.rel target = $region3
    $region8: #{tpu_custom_call.1} parent=1 // loop_exit
      _
    %451 = vsyncpa [#allocation3], 1
    %s452 = scalar_lea.sflag [#allocation3], 1
    %453 = vsyncpa %s452, 1
    %454 = vsyncpa [#allocation4], 1
    %s455 = scalar_lea.sflag [#allocation4], 1
    %456 = vsyncpa %s455, 1

</llo_original>
